<compile_context>
chip_gen: v5e
topology: v5e:2x2
jax: 0.10.0
libtpu: 0.0.40
codegen_flags: <defaults>
</compile_context>

<pallas_src>
import functools

import jax
import jax.numpy as jnp
from jax import lax
from jax.experimental import pallas as pl
from jax.experimental.pallas import tpu as pltpu

_P = 10  # exponent from pth_norm_loss.__init__ (self.p = 10)


def _pnorm_partial_kernel(t_ref, o_ref, out_ref, *, batch, tb, need_mask):
    # t_ref / o_ref: (TB, R, L) blocks of channel 0 (channel dim squeezed by the
    # BlockSpec).  All math in f32.
    diff = t_ref[...].astype(jnp.float32) - o_ref[...].astype(jnp.float32)

    # diff ** 10 via repeated squaring: 4 VPU multiplies per element.
    d2 = diff * diff
    d4 = d2 * d2
    d8 = d4 * d4
    p = d8 * d2

    if need_mask:
        # Ragged last batch tile: zero out rows past the true batch size.
        row = pl.program_id(0) * tb + lax.broadcasted_iota(jnp.int32, p.shape, 0)
        p = jnp.where(row < batch, p, 0.0)

    # Reduce the block down to a lane-dense (1, L) partial: the leading-axis
    # sum is plain VPU adds across vregs; only the final sublane reduce uses
    # the XLU, once per grid step.
    partial = jnp.sum(p, axis=0)                             # (R, L)
    out_ref[...] = jnp.sum(partial, axis=0, keepdims=True)   # (1, L)


def pth_norm_loss(target: jax.Array, output: jax.Array, *, tile_batch=None) -> jax.Array:
    """Pallas equivalent of pth_norm_loss.forward:
    mean((target[:, 0] - output[:, 0]) ** 10) for NCHW inputs."""
    assert target.shape == output.shape
    B, C, H, W = target.shape
    HW = H * W

    # Lane-dense layout: fold H*W into (R, L) with L = 128 when possible so the
    # last dim fills the 128-lane axis; otherwise fall back to a single row of
    # length H*W (still correct, just lane-padded).
    if HW % 128 == 0:
        L = 128
        R = HW // 128
    else:
        L = HW
        R = 1
    t = target.reshape(B, C, R, L)   # contiguous reshape: free
    o = output.reshape(B, C, R, L)

    # Batch tile: aim for ~2 MiB per input block so each grid step moves MiBs
    # against the fixed per-step overhead.  Double-buffered inputs then cost
    # ~8 MiB of VMEM, safely under every generation's limit.
    if tile_batch is None:
        bytes_per_row = HW * t.dtype.itemsize
        TB = max(1, min(B, (2 * 1024 * 1024) // max(1, bytes_per_row)))
    else:
        TB = max(1, min(B, int(tile_batch)))
    NB = pl.cdiv(B, TB)
    need_mask = (NB * TB) != B

    # Channel 0 selected directly by the index_map; channel dim squeezed away.
    in_spec = pl.BlockSpec((TB, None, R, L), lambda b: (b, 0, 0, 0))
    out_spec = pl.BlockSpec((1, L), lambda b: (b, 0))

    kernel = functools.partial(
        _pnorm_partial_kernel, batch=B, tb=TB, need_mask=need_mask
    )

    partials = pl.pallas_call(
        kernel,
        out_shape=jax.ShapeDtypeStruct((NB, L), jnp.float32),
        grid_spec=pltpu.PrefetchScalarGridSpec(
            num_scalar_prefetch=0,
            grid=(NB,),
            in_specs=[in_spec, in_spec],
            out_specs=out_spec,
        ),
        compiler_params=pltpu.CompilerParams(
            # Each grid step writes its own partial-sum block, so the batch
            # axis is genuinely parallel (v7x megacore uses both TensorCores).
            dimension_semantics=("parallel",),
            vmem_limit_bytes=32 * 1024 * 1024,
        ),
    )(t, o)

    # Tiny final reduction + mean normalization over B*H*W elements.
    return jnp.sum(partials) / jnp.float32(B * HW)


if __name__ == "__main__":
    key = jax.random.PRNGKey(0)
    k_t, k_o = jax.random.split(key)

    B, C, H, W = 2, 4, 16, 16
    target = jax.random.normal(k_t, (B, C, H, W), dtype=jnp.float32)
    output = jax.random.normal(k_o, (B, C, H, W), dtype=jnp.float32)

    loss = pth_norm_loss(target, output)
    jax.block_until_ready(loss)

    ref = jnp.mean((target[:, 0] - output[:, 0]) ** _P)
    assert jnp.allclose(loss, ref, rtol=1e-4, atol=1e-6), (loss, ref)

    # Ragged / non-128-lane shape: exercises tail masking (B % TB != 0) and the
    # fallback lane layout (H*W not a multiple of 128).
    B2, C2, H2, W2 = 3, 2, 8, 20
    k_t2, k_o2 = jax.random.split(k_o)
    target2 = jax.random.normal(k_t2, (B2, C2, H2, W2), dtype=jnp.float32)
    output2 = jax.random.normal(k_o2, (B2, C2, H2, W2), dtype=jnp.float32)
    loss2 = pth_norm_loss(target2, output2, tile_batch=2)
    jax.block_until_ready(loss2)
    ref2 = jnp.mean((target2[:, 0] - output2[:, 0]) ** _P)
    assert jnp.allclose(loss2, ref2, rtol=1e-4, atol=1e-6), (loss2, ref2)

    print("KERNEL_OK")
</pallas_src>

<mosaic_0001>
module attributes {stable_mosaic.version = 11 : i64} {
  func.func @_pnorm_partial_kernel(%arg0: i32, %arg1: memref<2x1x2x128xf32, #tpu.memory_space<vmem>>, %arg2: memref<2x1x2x128xf32, #tpu.memory_space<vmem>>, %arg3: memref<1x128xf32, #tpu.memory_space<vmem>>) attributes {dimension_semantics = [#tpu.dimension_semantics<parallel>], iteration_bounds = array<i64: 1>, scalar_prefetch = 0 : i64, scratch_operands = 0 : i64, tpu.core_type = #tpu.core_type<tc>, window_params = [{transform_indices = @transform_0, window_bounds = array<i64: 2, 1, 2, 128>}, {transform_indices = @transform_1, window_bounds = array<i64: 2, 1, 2, 128>}, {transform_indices = @transform_2, window_bounds = array<i64: 1, 128>}]} {
    %c0 = arith.constant 0 : index
    %c0_0 = arith.constant 0 : index
    %c0_1 = arith.constant 0 : index
    %c0_2 = arith.constant 0 : index
    %0 = vector.load %arg1[%c0, %c0_0, %c0_1, %c0_2] : memref<2x1x2x128xf32, #tpu.memory_space<vmem>>, vector<2x1x2x128xf32>
    %1 = vector.shape_cast %0 : vector<2x1x2x128xf32> to vector<2x2x128xf32>
    %c0_3 = arith.constant 0 : index
    %c0_4 = arith.constant 0 : index
    %c0_5 = arith.constant 0 : index
    %c0_6 = arith.constant 0 : index
    %2 = vector.load %arg2[%c0_3, %c0_4, %c0_5, %c0_6] : memref<2x1x2x128xf32, #tpu.memory_space<vmem>>, vector<2x1x2x128xf32>
    %3 = vector.shape_cast %2 : vector<2x1x2x128xf32> to vector<2x2x128xf32>
    %4 = arith.subf %1, %3 : vector<2x2x128xf32>
    %5 = arith.mulf %4, %4 : vector<2x2x128xf32>
    %6 = arith.mulf %5, %5 : vector<2x2x128xf32>
    %7 = arith.mulf %6, %6 : vector<2x2x128xf32>
    %8 = arith.mulf %7, %5 : vector<2x2x128xf32>
    %cst = arith.constant dense<0.000000e+00> : vector<2x128xf32>
    %9 = vector.multi_reduction <add>, %8, %cst [0] : vector<2x2x128xf32> to vector<2x128xf32>
    %cst_7 = arith.constant dense<0.000000e+00> : vector<128xf32>
    %10 = vector.multi_reduction <add>, %9, %cst_7 [0] : vector<2x128xf32> to vector<128xf32>
    %11 = vector.shape_cast %10 : vector<128xf32> to vector<1x128xf32>
    %c0_8 = arith.constant 0 : index
    %c0_9 = arith.constant 0 : index
    %12 = vector.load %arg3[%c0_8, %c0_9] : memref<1x128xf32, #tpu.memory_space<vmem>>, vector<1x128xf32>
    tpu.vector_store %arg3[%c0_8, %c0_9], %11 {strides = array<i32>} : memref<1x128xf32, #tpu.memory_space<vmem>>, vector<1x128xf32>,
    return
  }
  func.func @transform_0(%arg0: i32) -> (i32, i32, i32, i32) {
    %c0_i32 = arith.constant 0 : i32
    %c0_i32_0 = arith.constant 0 : i32
    %c0_i32_1 = arith.constant 0 : i32
    %c0_i32_2 = arith.constant 0 : i32
    return %arg0, %c0_i32, %c0_i32_0, %c0_i32_1 : i32, i32, i32, i32
  }
  func.func @transform_1(%arg0: i32) -> (i32, i32, i32, i32) {
    %c0_i32 = arith.constant 0 : i32
    %c0_i32_0 = arith.constant 0 : i32
    %c0_i32_1 = arith.constant 0 : i32
    %c0_i32_2 = arith.constant 0 : i32
    return %arg0, %c0_i32, %c0_i32_0, %c0_i32_1 : i32, i32, i32, i32
  }
  func.func @transform_2(%arg0: i32) -> (i32, i32) {
    %c0_i32 = arith.constant 0 : i32
    %c0_i32_0 = arith.constant 0 : i32
    return %arg0, %c0_i32 : i32, i32
  }
}

</mosaic_0001>

<llo_original>
// kernel: tpu_custom_call.1
$region0: #{tpu_custom_call.1}
  #allocation0 [shape = 'u32[]', space=smem, size = 0x4, offset = 0x4, fixed_abs, tag = 'smem constant byte address 0x4 - core index']
  #allocation1 [shape = 'u32[72,128]{1,0:T(1,128)}', space=vmem, size = 0x9000, scoped, tag = 'internal scratch']
  %s0 = inlined_call_operand.hbm [shape: f32[2,4,2,128], index: 0, kind: input, shape index: {}]
  %s1 = inlined_call_operand.hbm [shape: f32[2,4,2,128], index: 1, kind: input, shape index: {}]
  %s2 = inlined_call_operand.hbm [shape: f32[1,128], index: 2, kind: output, shape index: {}]
  %s3 = sld [smem:[#allocation0]]
  $region26: #{tpu_custom_call.1} parent=0
    _
  %s5 = ssub.s32 1, %s3
  %s6 = scalar_select 0, %s5, %s3
  $region1: #{tpu_custom_call.1} parent=0
    #allocation2 [shape = 'u8[2048]{0}', space=vmem, size = 0x800, scoped, tag = 'input window, operand 0, single buffered']
    #allocation3 [shape = 's32[1]{0}', space=sflag, size = 0x4, scoped, tag = 'scoped memory for tpu_custom_call.1']
    #allocation4 [shape = 's32[1]{0}', space=sflag, size = 0x4, scoped, tag = 'scoped memory for tpu_custom_call.1']
    #allocation5 [shape = 'u8[2048]{0}', space=vmem, size = 0x800, scoped, tag = 'input window, operand 1, single buffered']
    #allocation6 [shape = 's32[1]{0}', space=sflag, size = 0x4, scoped, tag = 'scoped memory for tpu_custom_call.1']
    #allocation7 [shape = 'u8[512]{0}', space=vmem, size = 0x400, scoped, tag = 'output window, operand 0, single buffered']
    %7 = vsyncpa [#allocation3], 0
    %8 = vsyncpa [#allocation6], 0
    %9 = vsyncpa [#allocation4], 0
    // Predicated region
    $region2: #{tpu_custom_call.1} parent=1 // pred_check
      _
    $region3: #{tpu_custom_call.1} parent=1 // pred_check_branch
      %11 = sbr.rel (0) target = $region5
    $region4: #{tpu_custom_call.1} parent=1 // pred_region
      %13 = vsyncadd [#allocation3], 0
      %s14 = sshll.u32 %s0, 4
      %s15 = int_to_ptr.hbm [resolvable:$true] %s14
      %s16 = sshll.u32 [#allocation2], 4
      %s17 = int_to_ptr.vmem [resolvable:$true] %s16
      %22 = dma.hbm_to_vmem [thread:$0]  %s15, 64, %s17, [#allocation3], 128, 32, 2
    $region5: #{tpu_custom_call.1} parent=1 // pred_fallthru
      _
    // Predicated region
    $region6: #{tpu_custom_call.1} parent=1 // pred_check
      _
    $region7: #{tpu_custom_call.1} parent=1 // pred_check_branch
      %24 = sbr.rel (0) target = $region9
    $region8: #{tpu_custom_call.1} parent=1 // pred_region
      %26 = vsyncadd [#allocation6], 0
      %s27 = sshll.u32 %s1, 4
      %s28 = int_to_ptr.hbm [resolvable:$true] %s27
      %s29 = sshll.u32 [#allocation5], 4
      %s30 = int_to_ptr.vmem [resolvable:$true] %s29
      %35 = dma.hbm_to_vmem [thread:$0]  %s28, 64, %s30, [#allocation6], 128, 32, 2
    $region9: #{tpu_custom_call.1} parent=1 // pred_fallthru
      _
    // Predicated region
    $region10: #{tpu_custom_call.1} parent=1 // pred_check
      _
    $region11: #{tpu_custom_call.1} parent=1 // pred_check_branch
      %37 = sbr.rel (0) target = $region13
    $region12: #{tpu_custom_call.1} parent=1 // pred_region
      %39 = dma.done [#allocation3], 64
    $region13: #{tpu_custom_call.1} parent=1 // pred_fallthru
      _
    // Predicated region
    $region14: #{tpu_custom_call.1} parent=1 // pred_check
      _
    $region15: #{tpu_custom_call.1} parent=1 // pred_check_branch
      %41 = sbr.rel (0) target = $region17
    $region16: #{tpu_custom_call.1} parent=1 // pred_region
      %43 = dma.done [#allocation6], 64
    $region17: #{tpu_custom_call.1} parent=1 // pred_fallthru
      _
    %v44 = vld [vmem:[#allocation2] sm:$0x3]
    %v45 = vld [vmem:[#allocation2 + $0x2] sm:$0x3]
    %v46 = vld [vmem:[#allocation5] sm:$0x3]
    %v47 = vld [vmem:[#allocation5 + $0x2] sm:$0x3]
    %v48 = vsub.f32 %v44, %v46
    %v49 = vsub.f32 %v45, %v47
    %v50 = vmul.f32 %v48, %v48
    %v51 = vmul.f32 %v49, %v49
    %v52 = vmul.f32 %v50, %v50
    %v53 = vmul.f32 %v51, %v51
    %v54 = vmul.f32 %v52, %v52
    %v55 = vmul.f32 %v53, %v53
    %v56 = vmul.f32 %v54, %v50
    %v57 = vmul.f32 %v55, %v51
    %vm58 = vcmask 1041408
    %v59 = vsel %vm58, %v56, 0.0
    %v60 = vsel %vm58, %v57, 0.0
    %v61 = vadd.f32 %v59, %v60
    %v62 = vsel %vm58, %v61, 0.0
    %v63 = vrot.slane %v62, 4
    %v64 = vadd.f32 %v62, %v63
    %v65 = vrot.slane %v64, 2
    %v66 = vadd.f32 %v64, %v65
    %v67 = vrot.slane %v66, 1
    %v68 = vadd.f32 %v66, %v67
    %69 = vst [vmem:[#allocation7] sm:$0x1] %v68
    // Predicated region
    $region18: #{tpu_custom_call.1} parent=1 // pred_check
      _
    $region19: #{tpu_custom_call.1} parent=1 // pred_check_branch
      %71 = sbr.rel (0) target = $region21
    $region20: #{tpu_custom_call.1} parent=1 // pred_region
      %73 = vsyncadd [#allocation4], 0
      %s75 = sshll.u32 [#allocation7], 4
      %s76 = int_to_ptr.vmem [resolvable:$true] %s75
      %s77 = sshll.u32 %s2, 4
      %s78 = int_to_ptr.hbm [resolvable:$true] %s77
      %80 = dma.vmem_to_hbm [thread:$0]  %s76, 16, %s78, [#allocation4]
    $region21: #{tpu_custom_call.1} parent=1 // pred_fallthru
      _
    // Predicated region
    $region22: #{tpu_custom_call.1} parent=1 // pred_check
      _
    $region23: #{tpu_custom_call.1} parent=1 // pred_check_branch
      %82 = sbr.rel (0) target = $region25
    $region24: #{tpu_custom_call.1} parent=1 // pred_region
      %84 = dma.done [#allocation4], 16
    $region25: #{tpu_custom_call.1} parent=1 // pred_fallthru
      _
    %85 = vsyncpa [#allocation3], 1
    %86 = vsyncpa [#allocation6], 1
    %87 = vsyncpa [#allocation4], 1

</llo_original>
